<compile_context>
chip_gen: v7x
topology: tpu7x:2x2x1
jax: 0.10.0
libtpu: 0.0.40
codegen_flags: <defaults>
</compile_context>

<pallas_src>
import jax
import jax.numpy as jnp
from jax import lax
from jax.experimental import pallas as pl
from jax.experimental.pallas import tpu as pltpu

_LANE = 128
_SUBLANE = 8


def _make_kernel(bblk, C, K, S, chunk, inv_hw):
    """Kernel over one batch block: x (bblk, C, S, 128) -> out (bblk, K, S, 128)."""
    n_full = S // chunk
    tail = S - n_full * chunk
    aligned = (chunk % _SUBLANE == 0)
    chunk_unroll = True if n_full <= 8 else 4
    batch_unroll = True if bblk <= 2 else 1

    def kernel(x_ref, clf_w_ref, clf_b_ref, seg_w_ref, seg_b_ref, out_ref):
        # Hoist all SMEM scalar reads out of the per-sample loop (they are
        # kernel-invocation constants; keeps the 2 scalar slots free for loop
        # control / DMA addressing).
        cw = [clf_w_ref[c] for c in range(C)]
        cb = clf_b_ref[0]
        sw = [[seg_w_ref[k * C + c] for c in range(C)] for k in range(K)]
        sb = [seg_b_ref[k] for k in range(K)]

        # Hoisted broadcast constant (JAX does not CSE broadcast_in_dim in loops).
        zero_chunk = jnp.zeros((chunk, _LANE), jnp.float32)

        def _start(r0):
            return pl.multiple_of(r0, _SUBLANE) if aligned else r0

        def per_sample(b, carry):
            # ---- pass 1: classifier pooled sum -------------------------------
            # Weighted combine per chunk on the VPU, single cross-lane reduce
            # (XLU) at the end, instead of C full reductions per sample.
            def weighted_chunk(r0, rows):
                w = cw[0] * x_ref[b, 0, pl.ds(r0, rows), :]
                for c in range(1, C):
                    w = w + cw[c] * x_ref[b, c, pl.ds(r0, rows), :]
                return w

            def pool_body(j, acc):
                return acc + weighted_chunk(_start(j * chunk), chunk)

            acc = lax.fori_loop(0, n_full, pool_body, zero_chunk,
                                unroll=chunk_unroll)
            total = jnp.sum(acc)
            if tail:
                total = total + jnp.sum(weighted_chunk(n_full * chunk, tail))
            logit = cb + inv_hw * total
            gate = (logit > 0.0).astype(jnp.float32)  # sigmoid(l) > 0.5 <=> l > 0

            # ---- pass 2: seg branch (1x1 conv as scalar-weight FMAs) ---------
            # Re-reads x from VMEM (no extra HBM traffic); chunking bounds the
            # live vreg set to ~ (C+1)*chunk/8 registers.
            def seg_chunk(r0, rows):
                xs = [x_ref[b, c, pl.ds(r0, rows), :] for c in range(C)]
                for k in range(K):
                    a = sw[k][0] * xs[0]
                    for c in range(1, C):
                        a = a + sw[k][c] * xs[c]
                    out_ref[b, k, pl.ds(r0, rows), :] = gate * jax.nn.sigmoid(
                        a + sb[k])

            def seg_body(j, carry2):
                seg_chunk(_start(j * chunk), chunk)
                return carry2

            lax.fori_loop(0, n_full, seg_body, 0, unroll=chunk_unroll)
            if tail:
                seg_chunk(n_full * chunk, tail)
            return carry

        lax.fori_loop(0, bblk, per_sample, 0, unroll=batch_unroll)

    return kernel


@jax.jit
def combonet_forward(x, clf_w, clf_b, seg_w, seg_b):
    """x: (B, C, H, W) f32. Returns (B, K, H, W) f32."""
    B, C, H, W = x.shape
    K = seg_w.shape[0]
    HW = H * W
    S = pl.cdiv(HW, _LANE)          # sublane rows per channel
    HWp = S * _LANE

    xf = x.astype(jnp.float32).reshape(B, C, HW)
    if HWp != HW:
        # TODO(synk): handle the ragged last lane tile with an in-kernel masked
        # store instead of this extra pad copy / output slice.
        xf = jnp.pad(xf, ((0, 0), (0, 0), (0, HWp - HW)))
    xf = xf.reshape(B, C, S, _LANE)             # lane-dense layout, free reshape

    # ---- grid / block sizing ------------------------------------------------
    Sp = -(-S // _SUBLANE) * _SUBLANE           # sublane-padded rows in VMEM
    per_sample_vmem = (C + K) * Sp * _LANE * 4  # in + out bytes per sample

    # ~8 MiB per grid step: amortizes the ~0.35us per-step overhead on
    # v5e/v6e while double-buffered blocks still fit v7x's 64 MiB VMEM.
    step_target = 8 << 20
    budget_bblk = max(1, step_target // max(per_sample_vmem, 1))
    # Keep at least 2-4 grid steps so the pipeline overlaps and the parallel
    # batch axis can shard across v7x's two TensorCores.
    min_steps = min(B, 4)
    bblk = max(1, min(budget_bblk, B // min_steps))
    grid_steps = pl.cdiv(B, bblk)               # ragged last block is fine

    chunk = min(S, 32)                          # sublane rows per inner chunk

    block_vmem = bblk * per_sample_vmem
    vmem_limit = int(min(112 << 20, max(16 << 20, 2 * block_vmem + (4 << 20))))

    kernel = _make_kernel(bblk, C, K, S, chunk, 1.0 / float(HW))

    smem = pl.BlockSpec(memory_space=pltpu.MemorySpace.SMEM)
    out = pl.pallas_call(
        kernel,
        out_shape=jax.ShapeDtypeStruct((B, K, S, _LANE), jnp.float32),
        grid_spec=pltpu.PrefetchScalarGridSpec(
            num_scalar_prefetch=0,
            grid=(grid_steps,),
            in_specs=[
                pl.BlockSpec((bblk, C, S, _LANE), lambda i: (i, 0, 0, 0)),  # x
                smem,                                                       # clf_w (C,)
                smem,                                                       # clf_b (1,)
                smem,                                                       # seg_w (K*C,)
                smem,                                                       # seg_b (K,)
            ],
            out_specs=pl.BlockSpec((bblk, K, S, _LANE), lambda i: (i, 0, 0, 0)),
        ),
        compiler_params=pltpu.CompilerParams(
            dimension_semantics=("parallel",),
            vmem_limit_bytes=vmem_limit,
        ),
    )(
        xf,
        clf_w.reshape(C).astype(jnp.float32),
        clf_b.reshape(1).astype(jnp.float32),
        seg_w.reshape(K * C).astype(jnp.float32),
        seg_b.reshape(K).astype(jnp.float32),
    )

    out = out.reshape(B, K, HWp)
    if HWp != HW:
        out = out[:, :, :HW]
    return out.reshape(B, K, H, W)


def combonet_ref(x, clf_w, clf_b, seg_w, seg_b):
    """Pure-JAX reference mirroring the PyTorch ComboNet forward."""
    pooled = x.mean(axis=(2, 3))                            # (B, C)
    logit = pooled @ clf_w + clf_b                          # (B,)
    clf_out = jnp.where(jax.nn.sigmoid(logit) > 0.5, 1.0, 0.0)
    mask = clf_out == 1.0                                   # has_ship_mask
    seg = jnp.einsum('kc,bchw->bkhw', seg_w, x) + seg_b[None, :, None, None]
    seg = jax.nn.sigmoid(seg)
    return jnp.where(mask[:, None, None, None], seg, 0.0)


if __name__ == "__main__":
    B, C, H, W, K = 2, 4, 16, 16, 3     # K = seg_net.num_classes

    key = jax.random.PRNGKey(0)
    kx, kcw, ksw, ksb = jax.random.split(key, 4)
    x = jax.random.normal(kx, (B, C, H, W), dtype=jnp.float32)
    clf_w = jax.random.normal(kcw, (C,), dtype=jnp.float32)          # linear C -> 1
    clf_b = jnp.asarray(0.1, dtype=jnp.float32)
    seg_w = 0.5 * jax.random.normal(ksw, (K, C), dtype=jnp.float32)  # 1x1 conv C -> K
    seg_b = 0.1 * jax.random.normal(ksb, (K,), dtype=jnp.float32)

    out = jax.block_until_ready(combonet_forward(x, clf_w, clf_b, seg_w, seg_b))
    ref = combonet_ref(x, clf_w, clf_b, seg_w, seg_b)

    assert out.shape == (B, K, H, W)
    assert jnp.allclose(out, ref, atol=1e-5, rtol=1e-5), "mismatch vs JAX reference"
    print("KERNEL_OK")
</pallas_src>

<mosaic_0001>
module attributes {stable_mosaic.version = 11 : i64} {
  func.func @kernel(%arg0: i32, %arg1: memref<1x4x2x128xf32, #tpu.memory_space<vmem>>, %arg2: memref<4xf32, #tpu.memory_space<smem>>, %arg3: memref<1xf32, #tpu.memory_space<smem>>, %arg4: memref<12xf32, #tpu.memory_space<smem>>, %arg5: memref<3xf32, #tpu.memory_space<smem>>, %arg6: memref<1x3x2x128xf32, #tpu.memory_space<vmem>>) attributes {dimension_semantics = [#tpu.dimension_semantics<parallel>], iteration_bounds = array<i64: 2>, scalar_prefetch = 0 : i64, scratch_operands = 0 : i64, tpu.core_type = #tpu.core_type<tc>, window_params = [{transform_indices = @transform_0, window_bounds = array<i64: 1, 4, 2, 128>}, {transform_indices = @transform_1, window_bounds = array<i64: 4>}, {transform_indices = @transform_2, window_bounds = array<i64: 1>}, {transform_indices = @transform_3, window_bounds = array<i64: 12>}, {transform_indices = @transform_4, window_bounds = array<i64: 3>}, {transform_indices = @transform_5, window_bounds = array<i64: 1, 3, 2, 128>}]} {
    %c0 = arith.constant 0 : index
    %0 = memref.load %arg2[%c0] : memref<4xf32, #tpu.memory_space<smem>>
    %c1 = arith.constant 1 : index
    %1 = memref.load %arg2[%c1] : memref<4xf32, #tpu.memory_space<smem>>
    %c2 = arith.constant 2 : index
    %2 = memref.load %arg2[%c2] : memref<4xf32, #tpu.memory_space<smem>>
    %c3 = arith.constant 3 : index
    %3 = memref.load %arg2[%c3] : memref<4xf32, #tpu.memory_space<smem>>
    %c0_0 = arith.constant 0 : index
    %4 = memref.load %arg3[%c0_0] : memref<1xf32, #tpu.memory_space<smem>>
    %c0_1 = arith.constant 0 : index
    %5 = memref.load %arg4[%c0_1] : memref<12xf32, #tpu.memory_space<smem>>
    %c1_2 = arith.constant 1 : index
    %6 = memref.load %arg4[%c1_2] : memref<12xf32, #tpu.memory_space<smem>>
    %c2_3 = arith.constant 2 : index
    %7 = memref.load %arg4[%c2_3] : memref<12xf32, #tpu.memory_space<smem>>
    %c3_4 = arith.constant 3 : index
    %8 = memref.load %arg4[%c3_4] : memref<12xf32, #tpu.memory_space<smem>>
    %c4 = arith.constant 4 : index
    %9 = memref.load %arg4[%c4] : memref<12xf32, #tpu.memory_space<smem>>
    %c5 = arith.constant 5 : index
    %10 = memref.load %arg4[%c5] : memref<12xf32, #tpu.memory_space<smem>>
    %c6 = arith.constant 6 : index
    %11 = memref.load %arg4[%c6] : memref<12xf32, #tpu.memory_space<smem>>
    %c7 = arith.constant 7 : index
    %12 = memref.load %arg4[%c7] : memref<12xf32, #tpu.memory_space<smem>>
    %c8 = arith.constant 8 : index
    %13 = memref.load %arg4[%c8] : memref<12xf32, #tpu.memory_space<smem>>
    %c9 = arith.constant 9 : index
    %14 = memref.load %arg4[%c9] : memref<12xf32, #tpu.memory_space<smem>>
    %c10 = arith.constant 10 : index
    %15 = memref.load %arg4[%c10] : memref<12xf32, #tpu.memory_space<smem>>
    %c11 = arith.constant 11 : index
    %16 = memref.load %arg4[%c11] : memref<12xf32, #tpu.memory_space<smem>>
    %c0_5 = arith.constant 0 : index
    %17 = memref.load %arg5[%c0_5] : memref<3xf32, #tpu.memory_space<smem>>
    %c1_6 = arith.constant 1 : index
    %18 = memref.load %arg5[%c1_6] : memref<3xf32, #tpu.memory_space<smem>>
    %c2_7 = arith.constant 2 : index
    %19 = memref.load %arg5[%c2_7] : memref<3xf32, #tpu.memory_space<smem>>
    %cst = arith.constant 0.000000e+00 : f32
    %20 = vector.broadcast %cst : f32 to vector<2x128xf32>
    %c0_i32 = arith.constant 0 : i32
    %c0_i32_8 = arith.constant 0 : i32
    %c2_i32 = arith.constant 2 : i32
    %21 = arith.muli %c0_i32_8, %c2_i32 : i32
    %22 = arith.index_cast %c0_i32 : i32 to index
    %c0_9 = arith.constant 0 : index
    %23 = arith.index_cast %21 : i32 to index
    %c0_10 = arith.constant 0 : index
    %24 = vector.load %arg1[%22, %c0_9, %23, %c0_10] : memref<1x4x2x128xf32, #tpu.memory_space<vmem>>, vector<1x1x2x128xf32>
    %25 = vector.shape_cast %24 : vector<1x1x2x128xf32> to vector<2x128xf32>
    %26 = vector.broadcast %0 : f32 to vector<2x128xf32>
    %27 = arith.mulf %26, %25 : vector<2x128xf32>
    %28 = arith.index_cast %c0_i32 : i32 to index
    %c1_11 = arith.constant 1 : index
    %29 = arith.index_cast %21 : i32 to index
    %c0_12 = arith.constant 0 : index
    %30 = vector.load %arg1[%28, %c1_11, %29, %c0_12] : memref<1x4x2x128xf32, #tpu.memory_space<vmem>>, vector<1x1x2x128xf32>
    %31 = vector.shape_cast %30 : vector<1x1x2x128xf32> to vector<2x128xf32>
    %32 = vector.broadcast %1 : f32 to vector<2x128xf32>
    %33 = arith.mulf %32, %31 : vector<2x128xf32>
    %34 = arith.addf %27, %33 : vector<2x128xf32>
    %35 = arith.index_cast %c0_i32 : i32 to index
    %c2_13 = arith.constant 2 : index
    %36 = arith.index_cast %21 : i32 to index
    %c0_14 = arith.constant 0 : index
    %37 = vector.load %arg1[%35, %c2_13, %36, %c0_14] : memref<1x4x2x128xf32, #tpu.memory_space<vmem>>, vector<1x1x2x128xf32>
    %38 = vector.shape_cast %37 : vector<1x1x2x128xf32> to vector<2x128xf32>
    %39 = vector.broadcast %2 : f32 to vector<2x128xf32>
    %40 = arith.mulf %39, %38 : vector<2x128xf32>
    %41 = arith.addf %34, %40 : vector<2x128xf32>
    %42 = arith.index_cast %c0_i32 : i32 to index
    %c3_15 = arith.constant 3 : index
    %43 = arith.index_cast %21 : i32 to index
    %c0_16 = arith.constant 0 : index
    %44 = vector.load %arg1[%42, %c3_15, %43, %c0_16] : memref<1x4x2x128xf32, #tpu.memory_space<vmem>>, vector<1x1x2x128xf32>
    %45 = vector.shape_cast %44 : vector<1x1x2x128xf32> to vector<2x128xf32>
    %46 = vector.broadcast %3 : f32 to vector<2x128xf32>
    %47 = arith.mulf %46, %45 : vector<2x128xf32>
    %48 = arith.addf %41, %47 : vector<2x128xf32>
    %49 = arith.addf %20, %48 : vector<2x128xf32>
    %c1_i32 = arith.constant 1 : i32
    %50 = vector.shape_cast %49 : vector<2x128xf32> to vector<1x2x128xf32>
    %cst_17 = arith.constant dense<0.000000e+00> : vector<1xf32>
    %51 = vector.multi_reduction <add>, %50, %cst_17 [1, 2] : vector<1x2x128xf32> to vector<1xf32>
    %52 = vector.shape_cast %51 : vector<1xf32> to vector<1x1x1xf32>
    %53 = vector.extract %52[0, 0, 0] : f32 from vector<1x1x1xf32>
    %cst_18 = arith.constant 3.906250e-03 : f32
    %54 = arith.mulf %cst_18, %53 : f32
    %55 = arith.addf %4, %54 : f32
    %cst_19 = arith.constant 0.000000e+00 : f32
    %56 = arith.cmpf ogt, %55, %cst_19 : f32
    %57 = arith.extui %56 : i1 to i32
    %58 = arith.sitofp %57 : i32 to f32
    %c0_i32_20 = arith.constant 0 : i32
    %c2_i32_21 = arith.constant 2 : i32
    %59 = arith.muli %c0_i32_20, %c2_i32_21 : i32
    %60 = arith.index_cast %c0_i32 : i32 to index
    %c0_22 = arith.constant 0 : index
    %61 = arith.index_cast %59 : i32 to index
    %c0_23 = arith.constant 0 : index
    %62 = vector.load %arg1[%60, %c0_22, %61, %c0_23] : memref<1x4x2x128xf32, #tpu.memory_space<vmem>>, vector<1x1x2x128xf32>
    %63 = vector.shape_cast %62 : vector<1x1x2x128xf32> to vector<2x128xf32>
    %64 = arith.index_cast %c0_i32 : i32 to index
    %c1_24 = arith.constant 1 : index
    %65 = arith.index_cast %59 : i32 to index
    %c0_25 = arith.constant 0 : index
    %66 = vector.load %arg1[%64, %c1_24, %65, %c0_25] : memref<1x4x2x128xf32, #tpu.memory_space<vmem>>, vector<1x1x2x128xf32>
    %67 = vector.shape_cast %66 : vector<1x1x2x128xf32> to vector<2x128xf32>
    %68 = arith.index_cast %c0_i32 : i32 to index
    %c2_26 = arith.constant 2 : index
    %69 = arith.index_cast %59 : i32 to index
    %c0_27 = arith.constant 0 : index
    %70 = vector.load %arg1[%68, %c2_26, %69, %c0_27] : memref<1x4x2x128xf32, #tpu.memory_space<vmem>>, vector<1x1x2x128xf32>
    %71 = vector.shape_cast %70 : vector<1x1x2x128xf32> to vector<2x128xf32>
    %72 = arith.index_cast %c0_i32 : i32 to index
    %c3_28 = arith.constant 3 : index
    %73 = arith.index_cast %59 : i32 to index
    %c0_29 = arith.constant 0 : index
    %74 = vector.load %arg1[%72, %c3_28, %73, %c0_29] : memref<1x4x2x128xf32, #tpu.memory_space<vmem>>, vector<1x1x2x128xf32>
    %75 = vector.shape_cast %74 : vector<1x1x2x128xf32> to vector<2x128xf32>
    %76 = vector.broadcast %5 : f32 to vector<2x128xf32>
    %77 = arith.mulf %76, %63 : vector<2x128xf32>
    %78 = vector.broadcast %6 : f32 to vector<2x128xf32>
    %79 = arith.mulf %78, %67 : vector<2x128xf32>
    %80 = arith.addf %77, %79 : vector<2x128xf32>
    %81 = vector.broadcast %7 : f32 to vector<2x128xf32>
    %82 = arith.mulf %81, %71 : vector<2x128xf32>
    %83 = arith.addf %80, %82 : vector<2x128xf32>
    %84 = vector.broadcast %8 : f32 to vector<2x128xf32>
    %85 = arith.mulf %84, %75 : vector<2x128xf32>
    %86 = arith.addf %83, %85 : vector<2x128xf32>
    %87 = vector.broadcast %17 : f32 to vector<2x128xf32>
    %88 = arith.addf %86, %87 : vector<2x128xf32>
    %89 = arith.negf %88 : vector<2x128xf32>
    %90 = math.exp %89 : vector<2x128xf32>
    %cst_30 = arith.constant 1.000000e+00 : f32
    %91 = vector.broadcast %cst_30 : f32 to vector<2x128xf32>
    %92 = arith.addf %91, %90 : vector<2x128xf32>
    %93 = arith.divf %91, %92 : vector<2x128xf32>
    %94 = vector.broadcast %58 : f32 to vector<2x128xf32>
    %95 = arith.mulf %94, %93 : vector<2x128xf32>
    %96 = arith.index_cast %c0_i32 : i32 to index
    %c0_31 = arith.constant 0 : index
    %97 = arith.index_cast %59 : i32 to index
    %c0_32 = arith.constant 0 : index
    %98 = vector.load %arg6[%96, %c0_31, %97, %c0_32] : memref<1x3x2x128xf32, #tpu.memory_space<vmem>>, vector<1x1x2x128xf32>
    %99 = vector.shape_cast %98 : vector<1x1x2x128xf32> to vector<2x128xf32>
    %100 = vector.shape_cast %95 : vector<2x128xf32> to vector<1x1x2x128xf32>
    tpu.vector_store %arg6[%96, %c0_31, %97, %c0_32], %100 {strides = array<i32>} : memref<1x3x2x128xf32, #tpu.memory_space<vmem>>, vector<1x1x2x128xf32>,
    %101 = vector.broadcast %9 : f32 to vector<2x128xf32>
    %102 = arith.mulf %101, %63 : vector<2x128xf32>
    %103 = vector.broadcast %10 : f32 to vector<2x128xf32>
    %104 = arith.mulf %103, %67 : vector<2x128xf32>
    %105 = arith.addf %102, %104 : vector<2x128xf32>
    %106 = vector.broadcast %11 : f32 to vector<2x128xf32>
    %107 = arith.mulf %106, %71 : vector<2x128xf32>
    %108 = arith.addf %105, %107 : vector<2x128xf32>
    %109 = vector.broadcast %12 : f32 to vector<2x128xf32>
    %110 = arith.mulf %109, %75 : vector<2x128xf32>
    %111 = arith.addf %108, %110 : vector<2x128xf32>
    %112 = vector.broadcast %18 : f32 to vector<2x128xf32>
    %113 = arith.addf %111, %112 : vector<2x128xf32>
    %114 = arith.negf %113 : vector<2x128xf32>
    %115 = math.exp %114 : vector<2x128xf32>
    %cst_33 = arith.constant 1.000000e+00 : f32
    %116 = vector.broadcast %cst_33 : f32 to vector<2x128xf32>
    %117 = arith.addf %116, %115 : vector<2x128xf32>
    %118 = arith.divf %116, %117 : vector<2x128xf32>
    %119 = vector.broadcast %58 : f32 to vector<2x128xf32>
    %120 = arith.mulf %119, %118 : vector<2x128xf32>
    %121 = arith.index_cast %c0_i32 : i32 to index
    %c1_34 = arith.constant 1 : index
    %122 = arith.index_cast %59 : i32 to index
    %c0_35 = arith.constant 0 : index
    %123 = vector.load %arg6[%121, %c1_34, %122, %c0_35] : memref<1x3x2x128xf32, #tpu.memory_space<vmem>>, vector<1x1x2x128xf32>
    %124 = vector.shape_cast %123 : vector<1x1x2x128xf32> to vector<2x128xf32>
    %125 = vector.shape_cast %120 : vector<2x128xf32> to vector<1x1x2x128xf32>
    tpu.vector_store %arg6[%121, %c1_34, %122, %c0_35], %125 {strides = array<i32>} : memref<1x3x2x128xf32, #tpu.memory_space<vmem>>, vector<1x1x2x128xf32>,
    %126 = vector.broadcast %13 : f32 to vector<2x128xf32>
    %127 = arith.mulf %126, %63 : vector<2x128xf32>
    %128 = vector.broadcast %14 : f32 to vector<2x128xf32>
    %129 = arith.mulf %128, %67 : vector<2x128xf32>
    %130 = arith.addf %127, %129 : vector<2x128xf32>
    %131 = vector.broadcast %15 : f32 to vector<2x128xf32>
    %132 = arith.mulf %131, %71 : vector<2x128xf32>
    %133 = arith.addf %130, %132 : vector<2x128xf32>
    %134 = vector.broadcast %16 : f32 to vector<2x128xf32>
    %135 = arith.mulf %134, %75 : vector<2x128xf32>
    %136 = arith.addf %133, %135 : vector<2x128xf32>
    %137 = vector.broadcast %19 : f32 to vector<2x128xf32>
    %138 = arith.addf %136, %137 : vector<2x128xf32>
    %139 = arith.negf %138 : vector<2x128xf32>
    %140 = math.exp %139 : vector<2x128xf32>
    %cst_36 = arith.constant 1.000000e+00 : f32
    %141 = vector.broadcast %cst_36 : f32 to vector<2x128xf32>
    %142 = arith.addf %141, %140 : vector<2x128xf32>
    %143 = arith.divf %141, %142 : vector<2x128xf32>
    %144 = vector.broadcast %58 : f32 to vector<2x128xf32>
    %145 = arith.mulf %144, %143 : vector<2x128xf32>
    %146 = arith.index_cast %c0_i32 : i32 to index
    %c2_37 = arith.constant 2 : index
    %147 = arith.index_cast %59 : i32 to index
    %c0_38 = arith.constant 0 : index
    %148 = vector.load %arg6[%146, %c2_37, %147, %c0_38] : memref<1x3x2x128xf32, #tpu.memory_space<vmem>>, vector<1x1x2x128xf32>
    %149 = vector.shape_cast %148 : vector<1x1x2x128xf32> to vector<2x128xf32>
    %150 = vector.shape_cast %145 : vector<2x128xf32> to vector<1x1x2x128xf32>
    tpu.vector_store %arg6[%146, %c2_37, %147, %c0_38], %150 {strides = array<i32>} : memref<1x3x2x128xf32, #tpu.memory_space<vmem>>, vector<1x1x2x128xf32>,
    %c1_i32_39 = arith.constant 1 : i32
    %c1_i32_40 = arith.constant 1 : i32
    return
  }
  func.func @transform_0(%arg0: i32) -> (i32, i32, i32, i32) {
    %c0_i32 = arith.constant 0 : i32
    %c0_i32_0 = arith.constant 0 : i32
    %c0_i32_1 = arith.constant 0 : i32
    %c0_i32_2 = arith.constant 0 : i32
    return %arg0, %c0_i32, %c0_i32_0, %c0_i32_1 : i32, i32, i32, i32
  }
  func.func @transform_1(%arg0: i32) -> i32 {
    %c0_i32 = arith.constant 0 : i32
    %c0_i32_0 = arith.constant 0 : i32
    return %c0_i32 : i32
  }
  func.func @transform_2(%arg0: i32) -> i32 {
    %c0_i32 = arith.constant 0 : i32
    %c0_i32_0 = arith.constant 0 : i32
    return %c0_i32 : i32
  }
  func.func @transform_3(%arg0: i32) -> i32 {
    %c0_i32 = arith.constant 0 : i32
    %c0_i32_0 = arith.constant 0 : i32
    return %c0_i32 : i32
  }
  func.func @transform_4(%arg0: i32) -> i32 {
    %c0_i32 = arith.constant 0 : i32
    %c0_i32_0 = arith.constant 0 : i32
    return %c0_i32 : i32
  }
  func.func @transform_5(%arg0: i32) -> (i32, i32, i32, i32) {
    %c0_i32 = arith.constant 0 : i32
    %c0_i32_0 = arith.constant 0 : i32
    %c0_i32_1 = arith.constant 0 : i32
    %c0_i32_2 = arith.constant 0 : i32
    return %arg0, %c0_i32, %c0_i32_0, %c0_i32_1 : i32, i32, i32, i32
  }
}

</mosaic_0001>

<llo_original>
// kernel: combonet_forward.1
$region0: #{combonet_forward.1}
  #allocation0 [shape = 'u32[]', space=smem, size = 0x4, offset = 0x4, fixed_abs, tag = 'smem constant byte address 0x4 - core index']
  #allocation1 [shape = 'u32[144,128]{1,0:T(1,128)}', space=vmem, size = 0x12000, scoped, tag = 'internal scratch']
  #allocation2 [shape = 'f32[1]{0:T(128)S(6)}', space=smem, size = 0x200, scoped, tag = 'scoped memory for combonet_forward.1']
  %s0 = inlined_call_operand.vmem [shape: f32[2,4,2,128], index: 0, kind: input, shape index: {}]
  %s1 = inlined_call_operand.vmem [shape: f32[4], index: 1, kind: input, shape index: {}]
  %s2 = inlined_call_operand.<no memory space> [shape: f32[1], index: 2, kind: input, shape index: {}]
  %s3 = inlined_call_operand.vmem [shape: f32[12], index: 3, kind: input, shape index: {}]
  %s4 = inlined_call_operand.vmem [shape: f32[3], index: 4, kind: input, shape index: {}]
  %s5 = inlined_call_operand.vmem [shape: f32[2,3,2,128], index: 5, kind: output, shape index: {}]
  %s6 = sld [smem:[#allocation0]]
  $region65: #{combonet_forward.1} parent=0
    _
  %s8 = ssub.s32 1, %s6
  %s9 = scalar_select 0, %s8, %s6
  %10 = sst [smem:[#allocation2]] %s2
  $region1: #{combonet_forward.1} parent=0
    #allocation3 [shape = 'u8[512]{0}', space=smem, size = 0x200, scoped, tag = 'input window, operand 1, single buffered']
    #allocation4 [shape = 's32[2]{0}', space=sflag, size = 0x8, scoped, tag = 'scoped memory for combonet_forward.1']
    #allocation5 [shape = 'u8[512]{0}', space=smem, size = 0x200, scoped, tag = 'input window, operand 3, single buffered']
    #allocation6 [shape = 's32[1]{0}', space=sflag, size = 0x4, scoped, tag = 'scoped memory for combonet_forward.1']
    #allocation7 [shape = 'u8[512]{0}', space=smem, size = 0x200, scoped, tag = 'input window, operand 4, single buffered']
    %11 = vsyncpa [#allocation4], 0
    %12 = vsyncpa [#allocation6], 0
    loop: start=0, step=1, limit=4
    $region2: #{combonet_forward.1} parent=1 // loop_pre_header
      _
    $region3: #{combonet_forward.1} parent=1 // loop_header
      %s14 = sphi 0, %s18
      %p15 = scmp.ge.s32.totalorder %s14, 4
      %s24 = sphi 0, %s26
      %s27 = sphi 0, %s24
      %s28 = sphi 0, %s27
      %s44 = sphi 0, %s28
      %s48 = sphi 0, %s48
      %s50 = sphi 0, %s48
      %s51 = sphi 0, %s50
      %s65 = sphi 0, %s51
      %s69 = sphi 0, %s69
      %s71 = sphi 0, %s69
      %s72 = sphi 0, %s71
      %s86 = sphi 0, %s72
      %s90 = sphi 0, %s90
      %s92 = sphi 0, %s90
      %s93 = sphi 0, %s92
      %s107 = sphi 0, %s93
      %s111 = sphi 0, %s111
      %s113 = sphi 0, %s111
      %s114 = sphi 0, %s113
      %s128 = sphi 0, %s114
      %s134 = sphi 0, %s136
      %s137 = sphi 0, %s134
      %s138 = sphi 0, %s137
      %s154 = sphi 0, %s138
    $region4: #{combonet_forward.1} parent=1 // loop_header_branch
      %17 = sbr.rel (%p15) target = $region8
    $region5: #{combonet_forward.1} parent=1 // loop_body
      %s19 = ssub.s32 %s14, 1
      %s20 = ssub.s32 %s14, 2
      %s21 = sadd.s32 %s14, 1
      %s22 = ssub.s32 %s14, %s21
      %p23 = scmp.eq.s32.totalorder %s22, 0
      %s25 = sadd.s32 %s24, 1
      %s26 = scalar_select %p23, %s24, %s25
      %p29 = pneg %p23
      %p30 = scmp.eq.s32.totalorder %s14, 1
      %p31 = por %p29, %p30
      %p32 = scmp.ne.s32.totalorder %s24, %s27
      %p33 = scmp.eq.s32.totalorder %s14, 0
      %p34 = por %p32, %p33
      %p35 = scmp.ne.s32.totalorder %s24, %s27
      %p36 = scmp.eq.s32.totalorder %s19, 1
      %p37 = por %p35, %p36
      %p38 = scmp.ne.s32.totalorder %s27, %s28
      %p39 = scmp.eq.s32.totalorder %s19, 0
      %p40 = por %p38, %p39
      %p41 = scmp.ne.s32.totalorder %s27, %s28
      %p42 = scmp.eq.s32.totalorder %s20, 1
      %p43 = por %p41, %p42
      %p45 = scmp.ne.s32.totalorder %s28, %s44
      %p46 = scmp.eq.s32.totalorder %s20, 0
      %p47 = por %p45, %p46
      %s49 = sadd.s32 %s48, 1
      %p52 = scmp.eq.s32.totalorder %s14, 1
      %p53 = scmp.ne.s32.totalorder %s48, %s50
      %p54 = scmp.eq.s32.totalorder %s14, 0
      %p55 = por %p53, %p54
      %p56 = scmp.ne.s32.totalorder %s48, %s50
      %p57 = scmp.eq.s32.totalorder %s19, 1
      %p58 = por %p56, %p57
      %p59 = scmp.ne.s32.totalorder %s50, %s51
      %p60 = scmp.eq.s32.totalorder %s19, 0
      %p61 = por %p59, %p60
      %p62 = scmp.ne.s32.totalorder %s50, %s51
      %p63 = scmp.eq.s32.totalorder %s20, 1
      %p64 = por %p62, %p63
      %p66 = scmp.ne.s32.totalorder %s51, %s65
      %p67 = scmp.eq.s32.totalorder %s20, 0
      %p68 = por %p66, %p67
      %s70 = sadd.s32 %s69, 1
      %p73 = scmp.eq.s32.totalorder %s14, 1
      %p74 = scmp.ne.s32.totalorder %s69, %s71
      %p75 = scmp.eq.s32.totalorder %s14, 0
      %p76 = por %p74, %p75
      %p77 = scmp.ne.s32.totalorder %s69, %s71
      %p78 = scmp.eq.s32.totalorder %s19, 1
      %p79 = por %p77, %p78
      %p80 = scmp.ne.s32.totalorder %s71, %s72
      %p81 = scmp.eq.s32.totalorder %s19, 0
      %p82 = por %p80, %p81
      %p83 = scmp.ne.s32.totalorder %s71, %s72
      %p84 = scmp.eq.s32.totalorder %s20, 1
      %p85 = por %p83, %p84
      %p87 = scmp.ne.s32.totalorder %s72, %s86
      %p88 = scmp.eq.s32.totalorder %s20, 0
      %p89 = por %p87, %p88
      %s91 = sadd.s32 %s90, 1
      %p94 = scmp.eq.s32.totalorder %s14, 1
      %p95 = scmp.ne.s32.totalorder %s90, %s92
      %p96 = scmp.eq.s32.totalorder %s14, 0
      %p97 = por %p95, %p96
      %p98 = scmp.ne.s32.totalorder %s90, %s92
      %p99 = scmp.eq.s32.totalorder %s19, 1
      %p100 = por %p98, %p99
      %p101 = scmp.ne.s32.totalorder %s92, %s93
      %p102 = scmp.eq.s32.totalorder %s19, 0
      %p103 = por %p101, %p102
      %p104 = scmp.ne.s32.totalorder %s92, %s93
      %p105 = scmp.eq.s32.totalorder %s20, 1
      %p106 = por %p104, %p105
      %p108 = scmp.ne.s32.totalorder %s93, %s107
      %p109 = scmp.eq.s32.totalorder %s20, 0
      %p110 = por %p108, %p109
      %s112 = sadd.s32 %s111, 1
      %p115 = scmp.eq.s32.totalorder %s14, 1
      %p116 = scmp.ne.s32.totalorder %s111, %s113
      %p117 = scmp.eq.s32.totalorder %s14, 0
      %p118 = por %p116, %p117
      %p119 = scmp.ne.s32.totalorder %s111, %s113
      %p120 = scmp.eq.s32.totalorder %s19, 1
      %p121 = por %p119, %p120
      %p122 = scmp.ne.s32.totalorder %s113, %s114
      %p123 = scmp.eq.s32.totalorder %s19, 0
      %p124 = por %p122, %p123
      %p125 = scmp.ne.s32.totalorder %s113, %s114
      %p126 = scmp.eq.s32.totalorder %s20, 1
      %p127 = por %p125, %p126
      %p129 = scmp.ne.s32.totalorder %s114, %s128
      %p130 = scmp.eq.s32.totalorder %s20, 0
      %p131 = por %p129, %p130
      %s132 = ssub.s32 %s14, %s21
      %p133 = scmp.eq.s32.totalorder %s132, 0
      %s135 = sadd.s32 %s134, 1
      %s136 = scalar_select %p133, %s134, %s135
      %p139 = pneg %p133
      %p140 = scmp.eq.s32.totalorder %s14, 1
      %p141 = por %p139, %p140
      %p142 = scmp.ne.s32.totalorder %s134, %s137
      %p143 = scmp.eq.s32.totalorder %s14, 0
      %p144 = por %p142, %p143
      %p145 = scmp.ne.s32.totalorder %s134, %s137
      %p146 = scmp.eq.s32.totalorder %s19, 1
      %p147 = por %p145, %p146
      %p148 = scmp.ne.s32.totalorder %s137, %s138
      %p149 = scmp.eq.s32.totalorder %s19, 0
      %p150 = por %p148, %p149
      %p151 = scmp.ne.s32.totalorder %s137, %s138
      %p152 = scmp.eq.s32.totalorder %s20, 1
      %p153 = por %p151, %p152
      %p155 = scmp.ne.s32.totalorder %s138, %s154
      %p156 = scmp.eq.s32.totalorder %s20, 0
      %p157 = por %p155, %p156
      %p158 = scmp.le.s32.totalorder 1, %s14
      %p159 = scmp.lt.s32.totalorder %s14, 3
      %p160 = pnand %p158, %p159
      %p161 = pneg %p160
      // Predicated region
      $region9: #{combonet_forward.1} parent=5 // pred_check
        _
      $region10: #{combonet_forward.1} parent=5 // pred_check_branch
        %163 = sbr.rel (%p160) target = $region12
      $region11: #{combonet_forward.1} parent=5 // pred_region
        %s164 = ssub.s32 %s14, 1
        // Predicated region
        $region13: #{combonet_forward.1} parent=11 // pred_check
          %p165 = pneg %p61
        $region14: #{combonet_forward.1} parent=11 // pred_check_branch
          %167 = sbr.rel (%p165) target = $region16
        $region15: #{combonet_forward.1} parent=11 // pred_region
          %s169 = ssub.s32 16, 16
          %170 = vsyncadd [#allocation4], %s169
          %s172 = sshll.u32 %s1, 4
          %s173 = int_to_ptr.vmem [resolvable:$true] %s172
          %175 = dma.vmem_to_smem %s173, 16, [#allocation3], [#allocation4]
        $region16: #{combonet_forward.1} parent=11 // pred_fallthru
          _
        // Predicated region
        $region17: #{combonet_forward.1} parent=11 // pred_check
          %p176 = pneg %p82
        $region18: #{combonet_forward.1} parent=11 // pred_check_branch
          %178 = sbr.rel (%p176) target = $region20
        $region19: #{combonet_forward.1} parent=11 // pred_region
          _
        $region20: #{combonet_forward.1} parent=11 // pred_fallthru
          _
        // Predicated region
        $region21: #{combonet_forward.1} parent=11 // pred_check
          %p179 = pneg %p103
        $region22: #{combonet_forward.1} parent=11 // pred_check_branch
          %181 = sbr.rel (%p179) target = $region24
        $region23: #{combonet_forward.1} parent=11 // pred_region
          %s183 = ssub.s32 16, 16
          %184 = vsyncadd [#allocation6], %s183
          %s186 = sshll.u32 %s3, 4
          %s187 = int_to_ptr.vmem [resolvable:$true] %s186
          %189 = dma.vmem_to_smem %s187, 16, [#allocation5], [#allocation6]
        $region24: #{combonet_forward.1} parent=11 // pred_fallthru
          _
        // Predicated region
        $region25: #{combonet_forward.1} parent=11 // pred_check
          %p190 = pneg %p124
        $region26: #{combonet_forward.1} parent=11 // pred_check_branch
          %192 = sbr.rel (%p190) target = $region28
        $region27: #{combonet_forward.1} parent=11 // pred_region
          %s194 = ssub.s32 16, 16
          %195 = vsyncadd [#allocation6], %s194
          %s197 = sshll.u32 %s4, 4
          %s198 = int_to_ptr.vmem [resolvable:$true] %s197
          %200 = dma.vmem_to_smem %s198, 16, [#allocation7], [#allocation6]
        $region28: #{combonet_forward.1} parent=11 // pred_fallthru
          _
      $region12: #{combonet_forward.1} parent=5 // pred_fallthru
        _
      %p201 = scmp.lt.s32.totalorder %s14, 2
      // Predicated region
      $region29: #{combonet_forward.1} parent=5 // pred_check
        %p202 = pneg %p201
      $region30: #{combonet_forward.1} parent=5 // pred_check_branch
        %204 = sbr.rel (%p202) target = $region32
      $region31: #{combonet_forward.1} parent=5 // pred_region
        // Predicated region
        $region33: #{combonet_forward.1} parent=31 // pred_check
          %p205 = pneg %p34
        $region34: #{combonet_forward.1} parent=31 // pred_check_branch
          %207 = sbr.rel (%p205) target = $region36
        $region35: #{combonet_forward.1} parent=31 // pred_region
          %p208 = scmp.lt.s32.totalorder %s14, 1
          %s209 = scalar_select %p208, %s14, 1
          %s210 = smul.addr %s209, 4
          %s211 = smul.addr %s210, 2
          %s212 = scalar_lea.vmem %s0, %s211
        $region36: #{combonet_forward.1} parent=31 // pred_fallthru
          _
      $region32: #{combonet_forward.1} parent=5 // pred_fallthru
        _
      %p213 = scmp.le.s32.totalorder 1, %s14
      %p214 = scmp.lt.s32.totalorder %s14, 3
      %p215 = pnand %p213, %p214
      %p216 = pneg %p215
      // Predicated region
      $region37: #{combonet_forward.1} parent=5 // pred_check
        _
      $region38: #{combonet_forward.1} parent=5 // pred_check_branch
        %218 = sbr.rel (%p215) target = $region40
      $region39: #{combonet_forward.1} parent=5 // pred_region
        %s219 = ssub.s32 %s14, 1
        // Predicated region
        $region41: #{combonet_forward.1} parent=39 // pred_check
          %p220 = pneg %p61
        $region42: #{combonet_forward.1} parent=39 // pred_check_branch
          %222 = sbr.rel (%p220) target = $region44
        $region43: #{combonet_forward.1} parent=39 // pred_region
          %223 = dma.done [#allocation4], 16
        $region44: #{combonet_forward.1} parent=39 // pred_fallthru
          _
        // Predicated region
        $region45: #{combonet_forward.1} parent=39 // pred_check
          %p224 = pneg %p103
        $region46: #{combonet_forward.1} parent=39 // pred_check_branch
          %226 = sbr.rel (%p224) target = $region48
        $region47: #{combonet_forward.1} parent=39 // pred_region
          %227 = dma.done [#allocation6], 16
        $region48: #{combonet_forward.1} parent=39 // pred_fallthru
          _
        // Predicated region
        $region49: #{combonet_forward.1} parent=39 // pred_check
          %p228 = pneg %p124
        $region50: #{combonet_forward.1} parent=39 // pred_check_branch
          %230 = sbr.rel (%p228) target = $region52
        $region51: #{combonet_forward.1} parent=39 // pred_region
          %231 = dma.done [#allocation6], 16
        $region52: #{combonet_forward.1} parent=39 // pred_fallthru
          _
        %232 = sfence
        %p233 = scmp.lt.s32.totalorder %s19, 1
        %s234 = scalar_select %p233, %s19, 1
        %s235 = smul.addr %s234, 4
        %s236 = smul.addr %s235, 2
        %s237 = scalar_lea.vmem %s0, %s236
        %p238 = pneg %p40
        %p239 = pneg %p37
        %p240 = pneg %p61
        %p241 = pneg %p58
        %p242 = pneg %p82
        %p243 = pneg %p79
        %p244 = pneg %p103
        %p245 = pneg %p100
        %p246 = pneg %p124
        %p247 = pneg %p121
        %p248 = pneg %p150
        %p249 = pneg %p147
        %p250 = scmp.lt.s32.totalorder %s19, 1
        %s251 = scalar_select %p250, %s19, 1
        %s252 = smul.addr %s251, 3
        %s253 = smul.addr %s252, 2
        %s254 = scalar_lea.vmem %s5, %s253
        %p255 = scmp.lt.s32.totalorder %s19, 1
        %s256 = scalar_select %p255, %s19, 1
        %s257 = smul.addr %s256, 4
        %s258 = smul.addr %s257, 2
        %s259 = scalar_lea.vmem %s0, %s258
        %p260 = scmp.lt.s32.totalorder %s19, 1
        %s261 = scalar_select %p260, %s19, 1
        %s262 = smul.addr %s261, 3
        %s263 = smul.addr %s262, 2
        %s264 = scalar_lea.vmem %s5, %s263
        %s265 = sld [smem:[#allocation3]]
        %s266 = sld [smem:[#allocation3 + $0x1]]
        %s267 = sld [smem:[#allocation3 + $0x2]]
        %s268 = sld [smem:[#allocation3 + $0x3]]
        %s269 = sld [smem:[#allocation2]]
        %s270 = sld [smem:[#allocation5]]
        %s271 = sld [smem:[#allocation5 + $0x1]]
        %s272 = sld [smem:[#allocation5 + $0x2]]
        %s273 = sld [smem:[#allocation5 + $0x3]]
        %s274 = sld [smem:[#allocation5 + $0x4]]
        %s275 = sld [smem:[#allocation5 + $0x5]]
        %s276 = sld [smem:[#allocation5 + $0x6]]
        %s277 = sld [smem:[#allocation5 + $0x7]]
        %s278 = sld [smem:[#allocation5 + $0x8]]
        %s279 = sld [smem:[#allocation5 + $0x9]]
        %s280 = sld [smem:[#allocation5 + $0xa]]
        %s281 = sld [smem:[#allocation5 + $0xb]]
        %s282 = sld [smem:[#allocation7]]
        %s283 = sld [smem:[#allocation7 + $0x1]]
        %s284 = sld [smem:[#allocation7 + $0x2]]
        %v285 = vld [vmem:[%s259] sm:$0x3]
        %v286 = vstv %s265
        %v287 = vmul.f32 %v286, %v285
        %s288 = scalar_lea.vmem %s259, 2
        %v289 = vld [vmem:[%s288] sm:$0x3]
        %v290 = vstv %s266
        %v291 = vmul.f32 %v290, %v289
        %v292 = vadd.f32 %v287, %v291
        %s293 = scalar_lea.vmem %s259, 4
        %v294 = vld [vmem:[%s293] sm:$0x3]
        %v295 = vstv %s267
        %v296 = vmul.f32 %v295, %v294
        %v297 = vadd.f32 %v292, %v296
        %s298 = scalar_lea.vmem %s259, 6
        %v299 = vld [vmem:[%s298] sm:$0x3]
        %v300 = vstv %s268
        %v301 = vmul.f32 %v300, %v299
        %v302 = vadd.f32 %v297, %v301
        %v303 = vadd.f32 %v302, 0.0
        %vm304 = vcmask 1041408
        %v305 = vsel %vm304, %v303, 0.0
        %306 = vadd.xlane.f32.xlu0 %v305
        %v307 = vpop.xlane.xlu0 %306
        %v308 = vrot.slane %v307, 4
        %v309 = vadd.f32 %v307, %v308
        %v310 = vrot.slane %v309, 2
        %v311 = vadd.f32 %v309, %v310
        %v312 = vrot.slane %v311, 1
        %v313 = vadd.f32 %v311, %v312
        %s314 = vtos %v313
        %s315 = smul.f32 %s314, 0.00390625
        %s316 = sadd.f32 %s269, %s315
        %p317 = scmp.gt.f32.partialorder %s316, 0.0
        %s318 = scalar_select %p317, 1, 0
        %s319 = scvt.s32.f32 %s318
        %v320 = vstv %s270
        %v321 = vmul.f32 %v320, %v285
        %v322 = vstv %s271
        %v323 = vmul.f32 %v322, %v289
        %v324 = vadd.f32 %v321, %v323
        %v325 = vstv %s272
        %v326 = vmul.f32 %v325, %v294
        %v327 = vadd.f32 %v324, %v326
        %v328 = vstv %s273
        %v329 = vmul.f32 %v328, %v299
        %v330 = vadd.f32 %v327, %v329
        %v331 = vstv %s282
        %v332 = vadd.f32 %v330, %v331
        %v333 = vxor.u32 %v332, 2147483648
        %v334 = vmul.f32 %v333, 1.442695
        %v335 = vpow.pop %v334
        %v336 = vadd.f32 %v335, 1.0
        %v337 = vrcp.pop %v336
        %v338 = vmul.f32 1.0, %v337
        %v339 = vstv %s319
        %v340 = vmul.f32 %v339, %v338
        %341 = vst [vmem:[%s264] sm:$0x3] %v340
        %v342 = vstv %s274
        %v343 = vmul.f32 %v342, %v285
        %v344 = vstv %s275
        %v345 = vmul.f32 %v344, %v289
        %v346 = vadd.f32 %v343, %v345
        %v347 = vstv %s276
        %v348 = vmul.f32 %v347, %v294
        %v349 = vadd.f32 %v346, %v348
        %v350 = vstv %s277
        %v351 = vmul.f32 %v350, %v299
        %v352 = vadd.f32 %v349, %v351
        %v353 = vstv %s283
        %v354 = vadd.f32 %v352, %v353
        %v355 = vxor.u32 %v354, 2147483648
        %v356 = vmul.f32 %v355, 1.442695
        %v357 = vpow.pop %v356
        %v358 = vadd.f32 %v357, 1.0
        %v359 = vrcp.pop %v358
        %v360 = vmul.f32 1.0, %v359
        %v361 = vmul.f32 %v339, %v360
        %s362 = scalar_lea.vmem %s264, 2
        %363 = vst [vmem:[%s362] sm:$0x3] %v361
        %v364 = vstv %s278
        %v365 = vmul.f32 %v364, %v285
        %v366 = vstv %s279
        %v367 = vmul.f32 %v366, %v289
        %v368 = vadd.f32 %v365, %v367
        %v369 = vstv %s280
        %v370 = vmul.f32 %v369, %v294
        %v371 = vadd.f32 %v368, %v370
        %v372 = vstv %s281
        %v373 = vmul.f32 %v372, %v299
        %v374 = vadd.f32 %v371, %v373
        %v375 = vstv %s284
        %v376 = vadd.f32 %v374, %v375
        %v377 = vxor.u32 %v376, 2147483648
        %v378 = vmul.f32 %v377, 1.442695
        %v379 = vpow.pop %v378
        %v380 = vadd.f32 %v379, 1.0
        %v381 = vrcp.pop %v380
        %v382 = vmul.f32 1.0, %v381
        %v383 = vmul.f32 %v339, %v382
        %s384 = scalar_lea.vmem %s264, 4
        %385 = vst [vmem:[%s384] sm:$0x3] %v383
        %p386 = scmp.lt.s32.totalorder %s19, 1
        %s387 = scalar_select %p386, %s19, 1
        %s388 = smul.addr %s387, 3
        %s389 = smul.addr %s388, 2
        %s390 = scalar_lea.vmem %s5, %s389
        // Predicated region
        $region53: #{combonet_forward.1} parent=39 // pred_check
          %p391 = pneg %p147
        $region54: #{combonet_forward.1} parent=39 // pred_check_branch
          %393 = sbr.rel (%p391) target = $region56
        $region55: #{combonet_forward.1} parent=39 // pred_region
          _
        $region56: #{combonet_forward.1} parent=39 // pred_fallthru
          _
      $region40: #{combonet_forward.1} parent=5 // pred_fallthru
        _
      %p394 = scmp.le.s32.totalorder 2, %s14
      // Predicated region
      $region57: #{combonet_forward.1} parent=5 // pred_check
        %p395 = pneg %p394
      $region58: #{combonet_forward.1} parent=5 // pred_check_branch
        %397 = sbr.rel (%p395) target = $region60
      $region59: #{combonet_forward.1} parent=5 // pred_region
        %s398 = ssub.s32 %s14, 2
        // Predicated region
        $region61: #{combonet_forward.1} parent=59 // pred_check
          %p399 = pneg %p153
        $region62: #{combonet_forward.1} parent=59 // pred_check_branch
          %401 = sbr.rel (%p399) target = $region64
        $region63: #{combonet_forward.1} parent=59 // pred_region
          %p402 = scmp.lt.s32.totalorder %s20, 1
          %s403 = scalar_select %p402, %s20, 1
          %s404 = smul.addr %s403, 3
          %s405 = smul.addr %s404, 2
          %s406 = scalar_lea.vmem %s5, %s405
        $region64: #{combonet_forward.1} parent=59 // pred_fallthru
          _
      $region60: #{combonet_forward.1} parent=5 // pred_fallthru
        _
    $region6: #{combonet_forward.1} parent=1 // loop_footer
      %s18 = sadd.s32 1, %s14
    $region7: #{combonet_forward.1} parent=1 // loop_footer_branch
      %13 = sbr.rel target = $region3
    $region8: #{combonet_forward.1} parent=1 // loop_exit
      _
    %407 = vsyncpa [#allocation4], 1
    %s408 = scalar_lea.sflag [#allocation4], 1
    %409 = vsyncpa %s408, 1
    %410 = vsyncpa [#allocation6], 1

</llo_original>
